<compile_context>
chip_gen: v5e
topology: v5e:2x2
jax: 0.10.0
libtpu: 0.0.40
codegen_flags: <defaults>
</compile_context>

<pallas_src>
import functools

import jax
import jax.numpy as jnp
from jax.experimental import pallas as pl
from jax.experimental.pallas import tpu as pltpu


def _round_up(x, m):
    return (x + m - 1) // m * m


# ---------------------------------------------------------------------------
# Fused kernel: im2col conv (all windows) + maxpool + bias + LeakyReLU + FC
# ---------------------------------------------------------------------------
def _textcnn_kernel(x_ref, cw_ref, cb_ref, fw_ref, fb_ref, o_ref, *,
                    windows, seq_len, negative_slope):
    # x_ref : (TB, L + hmax - 1, E)        bf16   (seq zero-padded)
    # cw_ref: (n_w, hmax*E, F_pad)         bf16   (zero-padded taps / filters)
    # cb_ref: (n_w, F_pad)                 f32
    # fw_ref: (n_w*F_pad, C_pad)           f32
    # fb_ref: (1, C_pad)                   f32
    # o_ref : (TB, C_pad)                  f32
    hmax = max(windows)
    L = seq_len
    F_pad = cw_ref.shape[-1]

    x = x_ref[...]                                           # (TB, L+hmax-1, E)
    # Shared im2col patches: (TB, L, hmax*E), lane layout [tap0 E | tap1 E |..]
    patches = jnp.concatenate([x[:, k:k + L, :] for k in range(hmax)], axis=-1)

    cb_all = cb_ref[...]                                     # (n_w, F_pad)
    feats = []
    for idx, h in enumerate(windows):
        # One full-K MXU matmul per window (zero weight taps beyond h).
        acc = jax.lax.dot_general(
            patches, cw_ref[idx],
            dimension_numbers=(((2,), (0,)), ((), ())),
            preferred_element_type=jnp.float32)              # (TB, L, F_pad)
        # Global max-pool over the valid conv positions only.
        pooled = jnp.max(acc[:, :L - h + 1, :], axis=1)      # (TB, F_pad)
        # Bias + LeakyReLU hoisted past the max (exact: monotone activation).
        pooled = pooled + cb_all[idx]
        pooled = jnp.where(pooled > 0, pooled, negative_slope * pooled)
        feats.append(pooled)

    feat = jnp.concatenate(feats, axis=-1)                   # (TB, n_w*F_pad)
    # TODO(synk): nn.Dropout treated as identity (inference mode).
    o_ref[...] = (
        jnp.dot(feat, fw_ref[...], preferred_element_type=jnp.float32)
        + fb_ref[...]
    )


# ---------------------------------------------------------------------------
# Wrapper: packing, padding, grid / BlockSpecs
# ---------------------------------------------------------------------------
def text_cnn_forward(token_ids, params, *, windows_size, tile_b=8):
    windows = tuple(int(h) for h in windows_size)
    hmax = max(windows)
    n_w = len(windows)

    embed = params["embed"]                                  # (V, E)
    E = embed.shape[1]
    B, L = token_ids.shape
    F = params[f"conv_w_{windows[0]}"].shape[-1]
    C = params["fc_w"].shape[-1]

    F_pad = _round_up(F, 128)
    C_pad = _round_up(C, 128)
    K = hmax * E
    TILE_B = tile_b
    B_pad = _round_up(B, TILE_B)
    L_pad = L + hmax - 1

    # Embedding lookup (gather) in plain JAX.
    # TODO(synk): at large B*L*E, keep the table in HBM and gather inside the
    # kernel via PrefetchScalarGridSpec + pl.Element row indexing instead.
    x = jnp.take(embed, token_ids, axis=0).astype(jnp.bfloat16)   # (B, L, E)
    # Pad batch to the tile and seq by hmax-1 (padded taps hit zero weights).
    x = jnp.pad(x, ((0, B_pad - B), (0, hmax - 1), (0, 0)))        # (B_pad, L_pad, E)

    # Pack conv weights/biases: zero-pad taps to hmax and filters to F_pad.
    cw_blocks, cb_blocks = [], []
    for h in windows:
        w = params[f"conv_w_{h}"].reshape(h * E, F)                # (h*E, F)
        cw_blocks.append(jnp.pad(w, ((0, K - h * E), (0, F_pad - F))))
        cb_blocks.append(jnp.pad(params[f"conv_b_{h}"][0], (0, F_pad - F)))
    cw = jnp.stack(cw_blocks).astype(jnp.bfloat16)                 # (n_w, K, F_pad)
    cb = jnp.stack(cb_blocks).astype(jnp.float32)                  # (n_w, F_pad)

    # Pack FC weights to the padded feature layout: rows [i*F_pad : i*F_pad+F]
    # hold the real weights of window i, everything else is zero.
    fc_w = params["fc_w"]                                          # (n_w*F, C)
    fw = jnp.concatenate(
        [jnp.pad(fc_w[i * F:(i + 1) * F], ((0, F_pad - F), (0, C_pad - C)))
         for i in range(n_w)], axis=0).astype(jnp.float32)         # (n_w*F_pad, C_pad)
    fb = jnp.pad(params["fc_b"], ((0, 0), (0, C_pad - C))).astype(jnp.float32)

    kernel = functools.partial(
        _textcnn_kernel, windows=windows, seq_len=L, negative_slope=0.01)

    out = pl.pallas_call(
        kernel,
        out_shape=jax.ShapeDtypeStruct((B_pad, C_pad), jnp.float32),
        grid_spec=pltpu.PrefetchScalarGridSpec(
            num_scalar_prefetch=0,
            grid=(B_pad // TILE_B,),
            in_specs=[
                pl.BlockSpec((TILE_B, L_pad, E), lambda b: (b, 0, 0)),   # x
                pl.BlockSpec((n_w, K, F_pad), lambda b: (0, 0, 0)),      # conv w
                pl.BlockSpec((n_w, F_pad), lambda b: (0, 0)),            # conv b
                pl.BlockSpec((n_w * F_pad, C_pad), lambda b: (0, 0)),    # fc w
                pl.BlockSpec((1, C_pad), lambda b: (0, 0)),              # fc b
            ],
            out_specs=pl.BlockSpec((TILE_B, C_pad), lambda b: (b, 0)),
        ),
        compiler_params=pltpu.CompilerParams(
            dimension_semantics=("parallel",),        # 2 TCs on v7x
            vmem_limit_bytes=32 * 1024 * 1024,        # safe on v5e/v6e/v7x
        ),
    )(x, cw, cb, fw, fb)

    return out[:B, :C]


# ---------------------------------------------------------------------------
# Pure-JAX reference (f32) for a correctness check
# ---------------------------------------------------------------------------
def text_cnn_reference(token_ids, params, *, windows_size):
    x = jnp.take(params["embed"], token_ids, axis=0)               # (B, L, E)
    L = x.shape[1]
    pooled = []
    for h in windows_size:
        w = params[f"conv_w_{h}"]                                  # (h, E, F)
        b = params[f"conv_b_{h}"]                                  # (1, F)
        L_out = L - h + 1
        acc = sum(jnp.einsum("ble,ef->blf", x[:, k:k + L_out, :], w[k])
                  for k in range(h)) + b[None, :, :].reshape(1, 1, -1)
        acc = jnp.where(acc > 0, acc, 0.01 * acc)                  # LeakyReLU
        pooled.append(jnp.max(acc, axis=1))                        # (B, F)
    feat = jnp.concatenate(pooled, axis=1)
    return feat @ params["fc_w"] + params["fc_b"]


def init_params(key, *, vocab_size, embedding_dim, windows_size,
                feature_size, n_class):
    params = {}
    keys = jax.random.split(key, 2 + 2 * len(windows_size) + 2)
    ki = iter(keys)
    params["embed"] = jax.random.normal(
        next(ki), (vocab_size, embedding_dim), jnp.float32) * 0.1
    for h in windows_size:
        params[f"conv_w_{h}"] = jax.random.normal(
            next(ki), (h, embedding_dim, feature_size), jnp.float32) * 0.1
        params[f"conv_b_{h}"] = jax.random.normal(
            next(ki), (1, feature_size), jnp.float32) * 0.1
    params["fc_w"] = jax.random.normal(
        next(ki), (feature_size * len(windows_size), n_class), jnp.float32) * 0.1
    params["fc_b"] = jax.random.normal(next(ki), (1, n_class), jnp.float32) * 0.1
    return params


if __name__ == "__main__":
    # Small shapes consistent with the module's forward.
    vocab_size = 50
    embedding_dim = 32
    max_len = 16
    windows_size = (2, 3, 4)
    feature_size = 8
    n_class = 4
    batch = 16            # 2 batch tiles -> exercises the grid pipeline

    key = jax.random.PRNGKey(0)
    k_tok, k_par = jax.random.split(key)
    token_ids = jax.random.randint(k_tok, (batch, max_len), 0, vocab_size)
    params = init_params(
        k_par,
        vocab_size=vocab_size,
        embedding_dim=embedding_dim,
        windows_size=windows_size,
        feature_size=feature_size,
        n_class=n_class,
    )

    fwd = jax.jit(functools.partial(text_cnn_forward, windows_size=windows_size))
    out = fwd(token_ids, params)
    jax.block_until_ready(out)
    assert out.shape == (batch, n_class), out.shape

    ref = text_cnn_reference(token_ids, params, windows_size=windows_size)
    max_err = float(jnp.max(jnp.abs(out - ref)))
    assert max_err < 2e-2, f"max abs error {max_err} vs f32 reference"

    print("KERNEL_OK")
</pallas_src>

<mosaic_0001>
module attributes {stable_mosaic.version = 11 : i64} {
  func.func @_textcnn_kernel(%arg0: i32, %arg1: memref<8x19x32xbf16, #tpu.memory_space<vmem>>, %arg2: memref<3x128x128xbf16, #tpu.memory_space<vmem>>, %arg3: memref<3x128xf32, #tpu.memory_space<vmem>>, %arg4: memref<384x128xf32, #tpu.memory_space<vmem>>, %arg5: memref<1x128xf32, #tpu.memory_space<vmem>>, %arg6: memref<8x128xf32, #tpu.memory_space<vmem>>) attributes {dimension_semantics = [#tpu.dimension_semantics<parallel>], iteration_bounds = array<i64: 2>, scalar_prefetch = 0 : i64, scratch_operands = 0 : i64, tpu.core_type = #tpu.core_type<tc>, window_params = [{transform_indices = @transform_0, window_bounds = array<i64: 8, 19, 32>}, {pipeline_mode = #tpu.pipeline_mode<synchronous>, transform_indices = @transform_1, window_bounds = array<i64: 3, 128, 128>}, {pipeline_mode = #tpu.pipeline_mode<synchronous>, transform_indices = @transform_2, window_bounds = array<i64: 3, 128>}, {pipeline_mode = #tpu.pipeline_mode<synchronous>, transform_indices = @transform_3, window_bounds = array<i64: 384, 128>}, {pipeline_mode = #tpu.pipeline_mode<synchronous>, transform_indices = @transform_4, window_bounds = array<i64: 1, 128>}, {transform_indices = @transform_5, window_bounds = array<i64: 8, 128>}]} {
    %c0 = arith.constant 0 : index
    %c0_0 = arith.constant 0 : index
    %c0_1 = arith.constant 0 : index
    %0 = vector.load %arg1[%c0, %c0_0, %c0_1] : memref<8x19x32xbf16, #tpu.memory_space<vmem>>, vector<8x19x32xbf16>
    %1 = vector.extract_strided_slice %0 {offsets = [0, 0, 0], sizes = [8, 16, 32], strides = [1, 1, 1]} : vector<8x19x32xbf16> to vector<8x16x32xbf16>
    %2 = vector.extract_strided_slice %0 {offsets = [0, 1, 0], sizes = [8, 16, 32], strides = [1, 1, 1]} : vector<8x19x32xbf16> to vector<8x16x32xbf16>
    %3 = vector.extract_strided_slice %0 {offsets = [0, 2, 0], sizes = [8, 16, 32], strides = [1, 1, 1]} : vector<8x19x32xbf16> to vector<8x16x32xbf16>
    %4 = vector.extract_strided_slice %0 {offsets = [0, 3, 0], sizes = [8, 16, 32], strides = [1, 1, 1]} : vector<8x19x32xbf16> to vector<8x16x32xbf16>
    %5 = tpu.concatenate %1, %2, %3, %4 in 2 : vector<8x16x32xbf16>, vector<8x16x32xbf16>, vector<8x16x32xbf16>, vector<8x16x32xbf16> -> vector<8x16x128xbf16>
    %c0_2 = arith.constant 0 : index
    %c0_3 = arith.constant 0 : index
    %6 = vector.load %arg3[%c0_2, %c0_3] : memref<3x128xf32, #tpu.memory_space<vmem>>, vector<3x128xf32>
    %c0_4 = arith.constant 0 : index
    %c0_5 = arith.constant 0 : index
    %c0_6 = arith.constant 0 : index
    %7 = vector.load %arg2[%c0_4, %c0_5, %c0_6] : memref<3x128x128xbf16, #tpu.memory_space<vmem>>, vector<1x128x128xbf16>
    %8 = vector.shape_cast %7 : vector<1x128x128xbf16> to vector<128x128xbf16>
    %cst = arith.constant dense<0.000000e+00> : vector<8x16x128xf32>
    %9 = tpu.matmul %5, %8, %cst {dimension_numbers = #tpu.dot_dimension_numbers<[2], [0], [0, 1], [1], [0, 0, 0, 1, 1, 1], [], []>} : vector<8x16x128xbf16>, vector<128x128xbf16>, vector<8x16x128xf32> -> vector<8x16x128xf32>
    %10 = vector.extract_strided_slice %9 {offsets = [0, 0, 0], sizes = [8, 15, 128], strides = [1, 1, 1]} : vector<8x16x128xf32> to vector<8x15x128xf32>
    %cst_7 = arith.constant dense<0xFF800000> : vector<8x128xf32>
    %11 = vector.multi_reduction <maximumf>, %10, %cst_7 [1] : vector<8x15x128xf32> to vector<8x128xf32>
    %12 = vector.extract_strided_slice %6 {offsets = [0, 0], sizes = [1, 128], strides = [1, 1]} : vector<3x128xf32> to vector<1x128xf32>
    %13 = vector.shape_cast %12 : vector<1x128xf32> to vector<128xf32>
    %14 = vector.shape_cast %13 : vector<128xf32> to vector<1x128xf32>
    %15 = vector.broadcast %14 : vector<1x128xf32> to vector<8x128xf32>
    %16 = arith.addf %11, %15 : vector<8x128xf32>
    %cst_8 = arith.constant 0.000000e+00 : f32
    %17 = vector.broadcast %cst_8 : f32 to vector<8x128xf32>
    %18 = arith.cmpf ogt, %16, %17 : vector<8x128xf32>
    %cst_9 = arith.constant 0.00999999977 : f32
    %19 = vector.broadcast %cst_9 : f32 to vector<8x128xf32>
    %20 = arith.mulf %19, %16 : vector<8x128xf32>
    %21 = arith.select %18, %16, %20 : vector<8x128xi1>, vector<8x128xf32>
    %c1 = arith.constant 1 : index
    %c0_10 = arith.constant 0 : index
    %c0_11 = arith.constant 0 : index
    %22 = vector.load %arg2[%c1, %c0_10, %c0_11] : memref<3x128x128xbf16, #tpu.memory_space<vmem>>, vector<1x128x128xbf16>
    %23 = vector.shape_cast %22 : vector<1x128x128xbf16> to vector<128x128xbf16>
    %cst_12 = arith.constant dense<0.000000e+00> : vector<8x16x128xf32>
    %24 = tpu.matmul %5, %23, %cst_12 {dimension_numbers = #tpu.dot_dimension_numbers<[2], [0], [0, 1], [1], [0, 0, 0, 1, 1, 1], [], []>} : vector<8x16x128xbf16>, vector<128x128xbf16>, vector<8x16x128xf32> -> vector<8x16x128xf32>
    %25 = vector.extract_strided_slice %24 {offsets = [0, 0, 0], sizes = [8, 14, 128], strides = [1, 1, 1]} : vector<8x16x128xf32> to vector<8x14x128xf32>
    %cst_13 = arith.constant dense<0xFF800000> : vector<8x128xf32>
    %26 = vector.multi_reduction <maximumf>, %25, %cst_13 [1] : vector<8x14x128xf32> to vector<8x128xf32>
    %27 = vector.extract_strided_slice %6 {offsets = [1, 0], sizes = [1, 128], strides = [1, 1]} : vector<3x128xf32> to vector<1x128xf32>
    %28 = vector.shape_cast %27 : vector<1x128xf32> to vector<128xf32>
    %29 = vector.shape_cast %28 : vector<128xf32> to vector<1x128xf32>
    %30 = vector.broadcast %29 : vector<1x128xf32> to vector<8x128xf32>
    %31 = arith.addf %26, %30 : vector<8x128xf32>
    %cst_14 = arith.constant 0.000000e+00 : f32
    %32 = vector.broadcast %cst_14 : f32 to vector<8x128xf32>
    %33 = arith.cmpf ogt, %31, %32 : vector<8x128xf32>
    %cst_15 = arith.constant 0.00999999977 : f32
    %34 = vector.broadcast %cst_15 : f32 to vector<8x128xf32>
    %35 = arith.mulf %34, %31 : vector<8x128xf32>
    %36 = arith.select %33, %31, %35 : vector<8x128xi1>, vector<8x128xf32>
    %c2 = arith.constant 2 : index
    %c0_16 = arith.constant 0 : index
    %c0_17 = arith.constant 0 : index
    %37 = vector.load %arg2[%c2, %c0_16, %c0_17] : memref<3x128x128xbf16, #tpu.memory_space<vmem>>, vector<1x128x128xbf16>
    %38 = vector.shape_cast %37 : vector<1x128x128xbf16> to vector<128x128xbf16>
    %cst_18 = arith.constant dense<0.000000e+00> : vector<8x16x128xf32>
    %39 = tpu.matmul %5, %38, %cst_18 {dimension_numbers = #tpu.dot_dimension_numbers<[2], [0], [0, 1], [1], [0, 0, 0, 1, 1, 1], [], []>} : vector<8x16x128xbf16>, vector<128x128xbf16>, vector<8x16x128xf32> -> vector<8x16x128xf32>
    %40 = vector.extract_strided_slice %39 {offsets = [0, 0, 0], sizes = [8, 13, 128], strides = [1, 1, 1]} : vector<8x16x128xf32> to vector<8x13x128xf32>
    %cst_19 = arith.constant dense<0xFF800000> : vector<8x128xf32>
    %41 = vector.multi_reduction <maximumf>, %40, %cst_19 [1] : vector<8x13x128xf32> to vector<8x128xf32>
    %42 = vector.extract_strided_slice %6 {offsets = [2, 0], sizes = [1, 128], strides = [1, 1]} : vector<3x128xf32> to vector<1x128xf32>
    %43 = vector.shape_cast %42 : vector<1x128xf32> to vector<128xf32>
    %44 = vector.shape_cast %43 : vector<128xf32> to vector<1x128xf32>
    %45 = vector.broadcast %44 : vector<1x128xf32> to vector<8x128xf32>
    %46 = arith.addf %41, %45 : vector<8x128xf32>
    %cst_20 = arith.constant 0.000000e+00 : f32
    %47 = vector.broadcast %cst_20 : f32 to vector<8x128xf32>
    %48 = arith.cmpf ogt, %46, %47 : vector<8x128xf32>
    %cst_21 = arith.constant 0.00999999977 : f32
    %49 = vector.broadcast %cst_21 : f32 to vector<8x128xf32>
    %50 = arith.mulf %49, %46 : vector<8x128xf32>
    %51 = arith.select %48, %46, %50 : vector<8x128xi1>, vector<8x128xf32>
    %52 = tpu.concatenate %21, %36, %51 in 1 : vector<8x128xf32>, vector<8x128xf32>, vector<8x128xf32> -> vector<8x384xf32>
    %c0_22 = arith.constant 0 : index
    %c0_23 = arith.constant 0 : index
    %53 = vector.load %arg4[%c0_22, %c0_23] : memref<384x128xf32, #tpu.memory_space<vmem>>, vector<384x128xf32>
    %cst_24 = arith.constant dense<0.000000e+00> : vector<8x128xf32>
    %54 = tpu.matmul %52, %53, %cst_24 {dimension_numbers = #tpu.dot_dimension_numbers<[1], [0], [0], [1], [0, 0, 1, 1], [], []>} : vector<8x384xf32>, vector<384x128xf32>, vector<8x128xf32> -> vector<8x128xf32>
    %c0_25 = arith.constant 0 : index
    %c0_26 = arith.constant 0 : index
    %55 = vector.load %arg5[%c0_25, %c0_26] : memref<1x128xf32, #tpu.memory_space<vmem>>, vector<1x128xf32>
    %56 = vector.broadcast %55 : vector<1x128xf32> to vector<8x128xf32>
    %57 = arith.addf %54, %56 : vector<8x128xf32>
    %c0_27 = arith.constant 0 : index
    %c0_28 = arith.constant 0 : index
    %58 = vector.load %arg6[%c0_27, %c0_28] : memref<8x128xf32, #tpu.memory_space<vmem>>, vector<8x128xf32>
    tpu.vector_store %arg6[%c0_27, %c0_28], %57 {strides = array<i32>} : memref<8x128xf32, #tpu.memory_space<vmem>>, vector<8x128xf32>,
    return
  }
  func.func @transform_0(%arg0: i32) -> (i32, i32, i32) {
    %c0_i32 = arith.constant 0 : i32
    %c0_i32_0 = arith.constant 0 : i32
    %c0_i32_1 = arith.constant 0 : i32
    return %arg0, %c0_i32, %c0_i32_0 : i32, i32, i32
  }
  func.func @transform_1(%arg0: i32) -> (i32, i32, i32) {
    %c0_i32 = arith.constant 0 : i32
    %c0_i32_0 = arith.constant 0 : i32
    %c0_i32_1 = arith.constant 0 : i32
    %c0_i32_2 = arith.constant 0 : i32
    return %c0_i32, %c0_i32_0, %c0_i32_1 : i32, i32, i32
  }
  func.func @transform_2(%arg0: i32) -> (i32, i32) {
    %c0_i32 = arith.constant 0 : i32
    %c0_i32_0 = arith.constant 0 : i32
    %c0_i32_1 = arith.constant 0 : i32
    return %c0_i32, %c0_i32_0 : i32, i32
  }
  func.func @transform_3(%arg0: i32) -> (i32, i32) {
    %c0_i32 = arith.constant 0 : i32
    %c0_i32_0 = arith.constant 0 : i32
    %c0_i32_1 = arith.constant 0 : i32
    return %c0_i32, %c0_i32_0 : i32, i32
  }
  func.func @transform_4(%arg0: i32) -> (i32, i32) {
    %c0_i32 = arith.constant 0 : i32
    %c0_i32_0 = arith.constant 0 : i32
    %c0_i32_1 = arith.constant 0 : i32
    return %c0_i32, %c0_i32_0 : i32, i32
  }
  func.func @transform_5(%arg0: i32) -> (i32, i32) {
    %c0_i32 = arith.constant 0 : i32
    %c0_i32_0 = arith.constant 0 : i32
    return %arg0, %c0_i32 : i32, i32
  }
}

</mosaic_0001>

<llo_original>
// kernel: text_cnn_forward.1
$region0: #{text_cnn_forward.1}
  #allocation0 [shape = 'u32[]', space=smem, size = 0x4, offset = 0x4, fixed_abs, tag = 'smem constant byte address 0x4 - core index']
  #allocation1 [shape = 'u32[72,128]{1,0:T(1,128)}', space=vmem, size = 0x9000, scoped, tag = 'internal scratch']
  %s0 = inlined_call_operand.vmem [shape: bf16[16,19,32], index: 0, kind: input, shape index: {}]
  %s1 = inlined_call_operand.vmem [shape: bf16[3,128,128], index: 1, kind: input, shape index: {}]
  %s2 = inlined_call_operand.vmem [shape: f32[3,128], index: 2, kind: input, shape index: {}]
  %s3 = inlined_call_operand.vmem [shape: f32[384,128], index: 3, kind: input, shape index: {}]
  %s4 = inlined_call_operand.vmem [shape: f32[1,128], index: 4, kind: input, shape index: {}]
  %s5 = inlined_call_operand.vmem [shape: f32[16,128], index: 5, kind: output, shape index: {}]
  %s6 = sld [smem:[#allocation0]]
  $region53: #{text_cnn_forward.1} parent=0
    _
  %s8 = ssub.s32 1, %s6
  %s9 = scalar_select 0, %s8, %s6
  loop: start=0, step=1, limit=4
  $region2: #{text_cnn_forward.1} parent=0 // loop_pre_header
    _
  $region3: #{text_cnn_forward.1} parent=0 // loop_header
    %s11 = sphi 0, %s15
    %p12 = scmp.ge.s32.totalorder %s11, 4
    %s21 = sphi 0, %s23
    %s24 = sphi 0, %s21
    %s25 = sphi 0, %s24
    %s41 = sphi 0, %s25
    %s45 = sphi 0, %s45
    %s47 = sphi 0, %s45
    %s48 = sphi 0, %s47
    %s62 = sphi 0, %s48
    %s66 = sphi 0, %s66
    %s68 = sphi 0, %s66
    %s69 = sphi 0, %s68
    %s83 = sphi 0, %s69
    %s87 = sphi 0, %s87
    %s89 = sphi 0, %s87
    %s90 = sphi 0, %s89
    %s104 = sphi 0, %s90
    %s108 = sphi 0, %s108
    %s110 = sphi 0, %s108
    %s111 = sphi 0, %s110
    %s125 = sphi 0, %s111
    %s131 = sphi 0, %s133
    %s134 = sphi 0, %s131
    %s135 = sphi 0, %s134
    %s151 = sphi 0, %s135
  $region4: #{text_cnn_forward.1} parent=0 // loop_header_branch
    %14 = sbr.rel (%p12) target = $region8
  $region5: #{text_cnn_forward.1} parent=0 // loop_body
    %s16 = ssub.s32 %s11, 1
    %s17 = ssub.s32 %s11, 2
    %s18 = sadd.s32 %s11, 1
    %s19 = ssub.s32 %s11, %s18
    %p20 = scmp.eq.s32.totalorder %s19, 0
    %s22 = sadd.s32 %s21, 1
    %s23 = scalar_select %p20, %s21, %s22
    %p26 = pneg %p20
    %p27 = scmp.eq.s32.totalorder %s11, 1
    %p28 = por %p26, %p27
    %p29 = scmp.ne.s32.totalorder %s21, %s24
    %p30 = scmp.eq.s32.totalorder %s11, 0
    %p31 = por %p29, %p30
    %p32 = scmp.ne.s32.totalorder %s21, %s24
    %p33 = scmp.eq.s32.totalorder %s16, 1
    %p34 = por %p32, %p33
    %p35 = scmp.ne.s32.totalorder %s24, %s25
    %p36 = scmp.eq.s32.totalorder %s16, 0
    %p37 = por %p35, %p36
    %p38 = scmp.ne.s32.totalorder %s24, %s25
    %p39 = scmp.eq.s32.totalorder %s17, 1
    %p40 = por %p38, %p39
    %p42 = scmp.ne.s32.totalorder %s25, %s41
    %p43 = scmp.eq.s32.totalorder %s17, 0
    %p44 = por %p42, %p43
    %s46 = sadd.s32 %s45, 1
    %p49 = scmp.eq.s32.totalorder %s11, 1
    %p50 = scmp.ne.s32.totalorder %s45, %s47
    %p51 = scmp.eq.s32.totalorder %s11, 0
    %p52 = por %p50, %p51
    %p53 = scmp.ne.s32.totalorder %s45, %s47
    %p54 = scmp.eq.s32.totalorder %s16, 1
    %p55 = por %p53, %p54
    %p56 = scmp.ne.s32.totalorder %s47, %s48
    %p57 = scmp.eq.s32.totalorder %s16, 0
    %p58 = por %p56, %p57
    %p59 = scmp.ne.s32.totalorder %s47, %s48
    %p60 = scmp.eq.s32.totalorder %s17, 1
    %p61 = por %p59, %p60
    %p63 = scmp.ne.s32.totalorder %s48, %s62
    %p64 = scmp.eq.s32.totalorder %s17, 0
    %p65 = por %p63, %p64
    %s67 = sadd.s32 %s66, 1
    %p70 = scmp.eq.s32.totalorder %s11, 1
    %p71 = scmp.ne.s32.totalorder %s66, %s68
    %p72 = scmp.eq.s32.totalorder %s11, 0
    %p73 = por %p71, %p72
    %p74 = scmp.ne.s32.totalorder %s66, %s68
    %p75 = scmp.eq.s32.totalorder %s16, 1
    %p76 = por %p74, %p75
    %p77 = scmp.ne.s32.totalorder %s68, %s69
    %p78 = scmp.eq.s32.totalorder %s16, 0
    %p79 = por %p77, %p78
    %p80 = scmp.ne.s32.totalorder %s68, %s69
    %p81 = scmp.eq.s32.totalorder %s17, 1
    %p82 = por %p80, %p81
    %p84 = scmp.ne.s32.totalorder %s69, %s83
    %p85 = scmp.eq.s32.totalorder %s17, 0
    %p86 = por %p84, %p85
    %s88 = sadd.s32 %s87, 1
    %p91 = scmp.eq.s32.totalorder %s11, 1
    %p92 = scmp.ne.s32.totalorder %s87, %s89
    %p93 = scmp.eq.s32.totalorder %s11, 0
    %p94 = por %p92, %p93
    %p95 = scmp.ne.s32.totalorder %s87, %s89
    %p96 = scmp.eq.s32.totalorder %s16, 1
    %p97 = por %p95, %p96
    %p98 = scmp.ne.s32.totalorder %s89, %s90
    %p99 = scmp.eq.s32.totalorder %s16, 0
    %p100 = por %p98, %p99
    %p101 = scmp.ne.s32.totalorder %s89, %s90
    %p102 = scmp.eq.s32.totalorder %s17, 1
    %p103 = por %p101, %p102
    %p105 = scmp.ne.s32.totalorder %s90, %s104
    %p106 = scmp.eq.s32.totalorder %s17, 0
    %p107 = por %p105, %p106
    %s109 = sadd.s32 %s108, 1
    %p112 = scmp.eq.s32.totalorder %s11, 1
    %p113 = scmp.ne.s32.totalorder %s108, %s110
    %p114 = scmp.eq.s32.totalorder %s11, 0
    %p115 = por %p113, %p114
    %p116 = scmp.ne.s32.totalorder %s108, %s110
    %p117 = scmp.eq.s32.totalorder %s16, 1
    %p118 = por %p116, %p117
    %p119 = scmp.ne.s32.totalorder %s110, %s111
    %p120 = scmp.eq.s32.totalorder %s16, 0
    %p121 = por %p119, %p120
    %p122 = scmp.ne.s32.totalorder %s110, %s111
    %p123 = scmp.eq.s32.totalorder %s17, 1
    %p124 = por %p122, %p123
    %p126 = scmp.ne.s32.totalorder %s111, %s125
    %p127 = scmp.eq.s32.totalorder %s17, 0
    %p128 = por %p126, %p127
    %s129 = ssub.s32 %s11, %s18
    %p130 = scmp.eq.s32.totalorder %s129, 0
    %s132 = sadd.s32 %s131, 1
    %s133 = scalar_select %p130, %s131, %s132
    %p136 = pneg %p130
    %p137 = scmp.eq.s32.totalorder %s11, 1
    %p138 = por %p136, %p137
    %p139 = scmp.ne.s32.totalorder %s131, %s134
    %p140 = scmp.eq.s32.totalorder %s11, 0
    %p141 = por %p139, %p140
    %p142 = scmp.ne.s32.totalorder %s131, %s134
    %p143 = scmp.eq.s32.totalorder %s16, 1
    %p144 = por %p142, %p143
    %p145 = scmp.ne.s32.totalorder %s134, %s135
    %p146 = scmp.eq.s32.totalorder %s16, 0
    %p147 = por %p145, %p146
    %p148 = scmp.ne.s32.totalorder %s134, %s135
    %p149 = scmp.eq.s32.totalorder %s17, 1
    %p150 = por %p148, %p149
    %p152 = scmp.ne.s32.totalorder %s135, %s151
    %p153 = scmp.eq.s32.totalorder %s17, 0
    %p154 = por %p152, %p153
    %p155 = scmp.le.s32.totalorder 1, %s11
    %p156 = scmp.lt.s32.totalorder %s11, 3
    %p157 = pnand %p155, %p156
    %p158 = pneg %p157
    // Predicated region
    $region9: #{text_cnn_forward.1} parent=5 // pred_check
      _
    $region10: #{text_cnn_forward.1} parent=5 // pred_check_branch
      %160 = sbr.rel (%p157) target = $region12
    $region11: #{text_cnn_forward.1} parent=5 // pred_region
      %s161 = ssub.s32 %s11, 1
      // Predicated region
      $region13: #{text_cnn_forward.1} parent=11 // pred_check
        %p162 = pneg %p58
      $region14: #{text_cnn_forward.1} parent=11 // pred_check_branch
        %164 = sbr.rel (%p162) target = $region16
      $region15: #{text_cnn_forward.1} parent=11 // pred_region
        _
      $region16: #{text_cnn_forward.1} parent=11 // pred_fallthru
        _
      // Predicated region
      $region17: #{text_cnn_forward.1} parent=11 // pred_check
        %p165 = pneg %p79
      $region18: #{text_cnn_forward.1} parent=11 // pred_check_branch
        %167 = sbr.rel (%p165) target = $region20
      $region19: #{text_cnn_forward.1} parent=11 // pred_region
        _
      $region20: #{text_cnn_forward.1} parent=11 // pred_fallthru
        _
      // Predicated region
      $region21: #{text_cnn_forward.1} parent=11 // pred_check
        %p168 = pneg %p100
      $region22: #{text_cnn_forward.1} parent=11 // pred_check_branch
        %170 = sbr.rel (%p168) target = $region24
      $region23: #{text_cnn_forward.1} parent=11 // pred_region
        _
      $region24: #{text_cnn_forward.1} parent=11 // pred_fallthru
        _
      // Predicated region
      $region25: #{text_cnn_forward.1} parent=11 // pred_check
        %p171 = pneg %p121
      $region26: #{text_cnn_forward.1} parent=11 // pred_check_branch
        %173 = sbr.rel (%p171) target = $region28
      $region27: #{text_cnn_forward.1} parent=11 // pred_region
        _
      $region28: #{text_cnn_forward.1} parent=11 // pred_fallthru
        _
    $region12: #{text_cnn_forward.1} parent=5 // pred_fallthru
      _
    %p174 = scmp.lt.s32.totalorder %s11, 2
    // Predicated region
    $region29: #{text_cnn_forward.1} parent=5 // pred_check
      %p175 = pneg %p174
    $region30: #{text_cnn_forward.1} parent=5 // pred_check_branch
      %177 = sbr.rel (%p175) target = $region32
    $region31: #{text_cnn_forward.1} parent=5 // pred_region
      // Predicated region
      $region33: #{text_cnn_forward.1} parent=31 // pred_check
        %p178 = pneg %p31
      $region34: #{text_cnn_forward.1} parent=31 // pred_check_branch
        %180 = sbr.rel (%p178) target = $region36
      $region35: #{text_cnn_forward.1} parent=31 // pred_region
        %s181 = smul.u32 8, %s11
        %p182 = scmp.lt.s32.totalorder %s181, 15
        %s183 = scalar_select %p182, %s181, 15
        %s184 = smul.addr %s183, 3
        %s185 = smul.addr %s184, 4
        %s186 = scalar_lea.vmem %s0, %s185
        %s187 = smul.u32 8, %s11
      $region36: #{text_cnn_forward.1} parent=31 // pred_fallthru
        _
    $region32: #{text_cnn_forward.1} parent=5 // pred_fallthru
      _
    %p188 = scmp.le.s32.totalorder 1, %s11
    %p189 = scmp.lt.s32.totalorder %s11, 3
    %p190 = pnand %p188, %p189
    %p191 = pneg %p190
    // Predicated region
    $region37: #{text_cnn_forward.1} parent=5 // pred_check
      _
    $region38: #{text_cnn_forward.1} parent=5 // pred_check_branch
      %193 = sbr.rel (%p190) target = $region40
    $region39: #{text_cnn_forward.1} parent=5 // pred_region
      %s194 = ssub.s32 %s11, 1
      %s195 = smul.u32 8, %s16
      %p196 = scmp.lt.s32.totalorder %s195, 15
      %s197 = scalar_select %p196, %s195, 15
      %s198 = smul.addr %s197, 3
      %s199 = smul.addr %s198, 4
      %s200 = scalar_lea.vmem %s0, %s199
      %p201 = pneg %p37
      %p202 = pneg %p34
      %p203 = pneg %p58
      %p204 = pneg %p55
      %p205 = pneg %p79
      %p206 = pneg %p76
      %p207 = pneg %p100
      %p208 = pneg %p97
      %p209 = pneg %p121
      %p210 = pneg %p118
      %p211 = pneg %p147
      %p212 = pneg %p144
      %p213 = scmp.lt.s32.totalorder %s16, 1
      %s214 = scalar_select %p213, %s16, 1
      %s215 = smul.addr %s214, 8
      %s216 = scalar_lea.vmem %s5, %s215
      %s217 = smul.u32 8, %s16
      %p218 = scmp.lt.s32.totalorder %s217, 15
      %s219 = scalar_select %p218, %s217, 15
      %s220 = smul.addr %s219, 3
      %s221 = smul.addr %s220, 4
      %s222 = scalar_lea.vmem %s0, %s221
      %s223 = smul.u32 8, %s16
      %p224 = scmp.lt.s32.totalorder %s16, 1
      %s225 = scalar_select %p224, %s16, 1
      %s226 = smul.addr %s225, 8
      %s227 = scalar_lea.vmem %s5, %s226
      %v228 = vld [vmem:[%s222] sm:$0xf]
      %v229 = vld [vmem:[%s222 + $0x4] sm:$0xf]
      %v230 = vld [vmem:[%s222 + $0x8] sm:$0x3]
      %v231 = vld [vmem:[%s222 + $0xc] sm:$0xf]
      %v232 = vld [vmem:[%s222 + $0x10] sm:$0xf]
      %v233 = vld [vmem:[%s222 + $0x14] sm:$0x3]
      %v234 = vld [vmem:[%s222 + $0x18] sm:$0xf]
      %v235 = vld [vmem:[%s222 + $0x1c] sm:$0xf]
      %v236 = vld [vmem:[%s222 + $0x20] sm:$0x3]
      %v237 = vld [vmem:[%s222 + $0x24] sm:$0xf]
      %v238 = vld [vmem:[%s222 + $0x28] sm:$0xf]
      %v239 = vld [vmem:[%s222 + $0x2c] sm:$0x3]
      %v240 = vld [vmem:[%s222 + $0x30] sm:$0xf]
      %v241 = vld [vmem:[%s222 + $0x34] sm:$0xf]
      %v242 = vld [vmem:[%s222 + $0x38] sm:$0x3]
      %v243 = vld [vmem:[%s222 + $0x3c] sm:$0xf]
      %v244 = vld [vmem:[%s222 + $0x40] sm:$0xf]
      %v245 = vld [vmem:[%s222 + $0x44] sm:$0x3]
      %v246 = vld [vmem:[%s222 + $0x48] sm:$0xf]
      %v247 = vld [vmem:[%s222 + $0x4c] sm:$0xf]
      %v248 = vld [vmem:[%s222 + $0x50] sm:$0x3]
      %v249 = vld [vmem:[%s222 + $0x54] sm:$0xf]
      %v250 = vld [vmem:[%s222 + $0x58] sm:$0xf]
      %v251 = vld [vmem:[%s222 + $0x5c] sm:$0x3]
      %v268 = vunpack.c.l.b16 %v228
      %v269 = vunpack.c.l.b16 %v229
      %v270 = vunpack.c.l.b16 %v231
      %v271 = vunpack.c.l.b16 %v232
      %v272 = vunpack.c.l.b16 %v234
      %v273 = vunpack.c.l.b16 %v235
      %v274 = vunpack.c.l.b16 %v237
      %v275 = vunpack.c.l.b16 %v238
      %v276 = vunpack.c.l.b16 %v240
      %v277 = vunpack.c.l.b16 %v241
      %v278 = vunpack.c.l.b16 %v243
      %v279 = vunpack.c.l.b16 %v244
      %v280 = vunpack.c.l.b16 %v246
      %v281 = vunpack.c.l.b16 %v247
      %v282 = vunpack.c.l.b16 %v249
      %v283 = vunpack.c.l.b16 %v250
      %v284 = vpack.c.b16 %v269, %v268
      %v285 = vpack.c.b16 %v271, %v270
      %v286 = vpack.c.b16 %v273, %v272
      %v287 = vpack.c.b16 %v275, %v274
      %v288 = vpack.c.b16 %v277, %v276
      %v289 = vpack.c.b16 %v279, %v278
      %v290 = vpack.c.b16 %v281, %v280
      %v291 = vpack.c.b16 %v283, %v282
      %v300 = vunpack.c.l.b16 %v230
      %v301 = vunpack.c.l.b16 %v233
      %v302 = vunpack.c.l.b16 %v236
      %v303 = vunpack.c.l.b16 %v239
      %v304 = vunpack.c.l.b16 %v242
      %v305 = vunpack.c.l.b16 %v245
      %v306 = vunpack.c.l.b16 %v248
      %v307 = vunpack.c.l.b16 %v251
      %v308 = vpack.c.b16 %v300, %v300
      %v309 = vpack.c.b16 %v301, %v301
      %v310 = vpack.c.b16 %v302, %v302
      %v311 = vpack.c.b16 %v303, %v303
      %v312 = vpack.c.b16 %v304, %v304
      %v313 = vpack.c.b16 %v305, %v305
      %v314 = vpack.c.b16 %v306, %v306
      %v315 = vpack.c.b16 %v307, %v307
      %vm316 = vsmask.f32 7424
      %v318 = vshrl.u32 %v284, 16
      %v320 = vshll.u32 %v284, 16
      %v322 = vrot.slane %v320, 1
      %v323 = vor.u32 %v318, %v322
      %v325 = vshll.u32 %v308, 16
      %v327 = vrot.slane %v325, 1
      %v328 = vsel %vm316, %v323, %v327
      %v330 = vshrl.u32 %v285, 16
      %v332 = vshll.u32 %v285, 16
      %v334 = vrot.slane %v332, 1
      %v335 = vor.u32 %v330, %v334
      %v337 = vshll.u32 %v309, 16
      %v339 = vrot.slane %v337, 1
      %v340 = vsel %vm316, %v335, %v339
      %v342 = vshrl.u32 %v286, 16
      %v344 = vshll.u32 %v286, 16
      %v346 = vrot.slane %v344, 1
      %v347 = vor.u32 %v342, %v346
      %v349 = vshll.u32 %v310, 16
      %v351 = vrot.slane %v349, 1
      %v352 = vsel %vm316, %v347, %v351
      %v354 = vshrl.u32 %v287, 16
      %v356 = vshll.u32 %v287, 16
      %v358 = vrot.slane %v356, 1
      %v359 = vor.u32 %v354, %v358
      %v361 = vshll.u32 %v311, 16
      %v363 = vrot.slane %v361, 1
      %v364 = vsel %vm316, %v359, %v363
      %v366 = vshrl.u32 %v288, 16
      %v368 = vshll.u32 %v288, 16
      %v370 = vrot.slane %v368, 1
      %v371 = vor.u32 %v366, %v370
      %v373 = vshll.u32 %v312, 16
      %v375 = vrot.slane %v373, 1
      %v376 = vsel %vm316, %v371, %v375
      %v378 = vshrl.u32 %v289, 16
      %v380 = vshll.u32 %v289, 16
      %v382 = vrot.slane %v380, 1
      %v383 = vor.u32 %v378, %v382
      %v385 = vshll.u32 %v313, 16
      %v387 = vrot.slane %v385, 1
      %v388 = vsel %vm316, %v383, %v387
      %v390 = vshrl.u32 %v290, 16
      %v392 = vshll.u32 %v290, 16
      %v394 = vrot.slane %v392, 1
      %v395 = vor.u32 %v390, %v394
      %v397 = vshll.u32 %v314, 16
      %v399 = vrot.slane %v397, 1
      %v400 = vsel %vm316, %v395, %v399
      %v402 = vshrl.u32 %v291, 16
      %v404 = vshll.u32 %v291, 16
      %v406 = vrot.slane %v404, 1
      %v407 = vor.u32 %v402, %v406
      %v409 = vshll.u32 %v315, 16
      %v411 = vrot.slane %v409, 1
      %v412 = vsel %vm316, %v407, %v411
      %413 = vrot.lane.b32.xlu0 %v328, 32
      %v414 = vpop.permute.xlu0 %413
      %415 = vrot.lane.b32.xlu0 %v340, 32
      %v416 = vpop.permute.xlu0 %415
      %417 = vrot.lane.b32.xlu0 %v352, 32
      %v418 = vpop.permute.xlu0 %417
      %419 = vrot.lane.b32.xlu0 %v364, 32
      %v420 = vpop.permute.xlu0 %419
      %421 = vrot.lane.b32.xlu0 %v376, 32
      %v422 = vpop.permute.xlu0 %421
      %423 = vrot.lane.b32.xlu0 %v388, 32
      %v424 = vpop.permute.xlu0 %423
      %425 = vrot.lane.b32.xlu0 %v400, 32
      %v426 = vpop.permute.xlu0 %425
      %427 = vrot.lane.b32.xlu0 %v412, 32
      %v428 = vpop.permute.xlu0 %427
      %vm429 = vcmask 1046528
      %v430 = vrot.slane %v284, 1
      %v431 = vrot.slane %v308, 1
      %v432 = vsel %vm429, %v430, %v431
      %v433 = vrot.slane %v285, 1
      %v434 = vrot.slane %v309, 1
      %v435 = vsel %vm429, %v433, %v434
      %v436 = vrot.slane %v286, 1
      %v437 = vrot.slane %v310, 1
      %v438 = vsel %vm429, %v436, %v437
      %v439 = vrot.slane %v287, 1
      %v440 = vrot.slane %v311, 1
      %v441 = vsel %vm429, %v439, %v440
      %v442 = vrot.slane %v288, 1
      %v443 = vrot.slane %v312, 1
      %v444 = vsel %vm429, %v442, %v443
      %v445 = vrot.slane %v289, 1
      %v446 = vrot.slane %v313, 1
      %v447 = vsel %vm429, %v445, %v446
      %v448 = vrot.slane %v290, 1
      %v449 = vrot.slane %v314, 1
      %v450 = vsel %vm429, %v448, %v449
      %v451 = vrot.slane %v291, 1
      %v452 = vrot.slane %v315, 1
      %v453 = vsel %vm429, %v451, %v452
      %454 = vrot.lane.b32.xlu0 %v432, 64
      %v455 = vpop.permute.xlu0 %454
      %456 = vrot.lane.b32.xlu0 %v435, 64
      %v457 = vpop.permute.xlu0 %456
      %458 = vrot.lane.b32.xlu0 %v438, 64
      %v459 = vpop.permute.xlu0 %458
      %460 = vrot.lane.b32.xlu0 %v441, 64
      %v461 = vpop.permute.xlu0 %460
      %462 = vrot.lane.b32.xlu0 %v444, 64
      %v463 = vpop.permute.xlu0 %462
      %464 = vrot.lane.b32.xlu0 %v447, 64
      %v465 = vpop.permute.xlu0 %464
      %466 = vrot.lane.b32.xlu0 %v450, 64
      %v467 = vpop.permute.xlu0 %466
      %468 = vrot.lane.b32.xlu0 %v453, 64
      %v469 = vpop.permute.xlu0 %468
      %vm470 = vsmask.f32 6400
      %v471 = vrot.slane %v318, 1
      %v472 = vrot.slane %v320, 2
      %v473 = vor.u32 %v471, %v472
      %v474 = vshrl.u32 %v308, 16
      %v476 = vrot.slane %v474, 1
      %v477 = vrot.slane %v325, 2
      %v478 = vor.u32 %v476, %v477
      %v479 = vsel %vm470, %v473, %v478
      %v480 = vrot.slane %v330, 1
      %v481 = vrot.slane %v332, 2
      %v482 = vor.u32 %v480, %v481
      %v483 = vshrl.u32 %v309, 16
      %v485 = vrot.slane %v483, 1
      %v486 = vrot.slane %v337, 2
      %v487 = vor.u32 %v485, %v486
      %v488 = vsel %vm470, %v482, %v487
      %v489 = vrot.slane %v342, 1
      %v490 = vrot.slane %v344, 2
      %v491 = vor.u32 %v489, %v490
      %v492 = vshrl.u32 %v310, 16
      %v494 = vrot.slane %v492, 1
      %v495 = vrot.slane %v349, 2
      %v496 = vor.u32 %v494, %v495
      %v497 = vsel %vm470, %v491, %v496
      %v498 = vrot.slane %v354, 1
      %v499 = vrot.slane %v356, 2
      %v500 = vor.u32 %v498, %v499
      %v501 = vshrl.u32 %v311, 16
      %v503 = vrot.slane %v501, 1
      %v504 = vrot.slane %v361, 2
      %v505 = vor.u32 %v503, %v504
      %v506 = vsel %vm470, %v500, %v505
      %v507 = vrot.slane %v366, 1
      %v508 = vrot.slane %v368, 2
      %v509 = vor.u32 %v507, %v508
      %v510 = vshrl.u32 %v312, 16
      %v512 = vrot.slane %v510, 1
      %v513 = vrot.slane %v373, 2
      %v514 = vor.u32 %v512, %v513
      %v515 = vsel %vm470, %v509, %v514
      %v516 = vrot.slane %v378, 1
      %v517 = vrot.slane %v380, 2
      %v518 = vor.u32 %v516, %v517
      %v519 = vshrl.u32 %v313, 16
      %v521 = vrot.slane %v519, 1
      %v522 = vrot.slane %v385, 2
      %v523 = vor.u32 %v521, %v522
      %v524 = vsel %vm470, %v518, %v523
      %v525 = vrot.slane %v390, 1
      %v526 = vrot.slane %v392, 2
      %v527 = vor.u32 %v525, %v526
      %v528 = vshrl.u32 %v314, 16
      %v530 = vrot.slane %v528, 1
      %v531 = vrot.slane %v397, 2
      %v532 = vor.u32 %v530, %v531
      %v533 = vsel %vm470, %v527, %v532
      %v534 = vrot.slane %v402, 1
      %v535 = vrot.slane %v404, 2
      %v536 = vor.u32 %v534, %v535
      %v537 = vshrl.u32 %v315, 16
      %v539 = vrot.slane %v537, 1
      %v540 = vrot.slane %v409, 2
      %v541 = vor.u32 %v539, %v540
      %v542 = vsel %vm470, %v536, %v541
      %543 = vrot.lane.b32.xlu0 %v479, 96
      %v544 = vpop.permute.xlu0 %543
      %545 = vrot.lane.b32.xlu0 %v488, 96
      %v546 = vpop.permute.xlu0 %545
      %547 = vrot.lane.b32.xlu0 %v497, 96
      %v548 = vpop.permute.xlu0 %547
      %549 = vrot.lane.b32.xlu0 %v506, 96
      %v550 = vpop.permute.xlu0 %549
      %551 = vrot.lane.b32.xlu0 %v515, 96
      %v552 = vpop.permute.xlu0 %551
      %553 = vrot.lane.b32.xlu0 %v524, 96
      %v554 = vpop.permute.xlu0 %553
      %555 = vrot.lane.b32.xlu0 %v533, 96
      %v556 = vpop.permute.xlu0 %555
      %557 = vrot.lane.b32.xlu0 %v542, 96
      %v558 = vpop.permute.xlu0 %557
      %vm559 = vcmask 261120
      %v561 = vsel %vm559, %v284, %v414
      %v563 = vsel %vm559, %v285, %v416
      %v565 = vsel %vm559, %v286, %v418
      %v567 = vsel %vm559, %v287, %v420
      %v569 = vsel %vm559, %v288, %v422
      %v571 = vsel %vm559, %v289, %v424
      %v573 = vsel %vm559, %v290, %v426
      %v575 = vsel %vm559, %v291, %v428
      %vm576 = vcmask 523264
      %v578 = vsel %vm576, %v561, %v455
      %v580 = vsel %vm576, %v563, %v457
      %v582 = vsel %vm576, %v565, %v459
      %v584 = vsel %vm576, %v567, %v461
      %v586 = vsel %vm576, %v569, %v463
      %v588 = vsel %vm576, %v571, %v465
      %v590 = vsel %vm576, %v573, %v467
      %v592 = vsel %vm576, %v575, %v469
      %vm593 = vcmask 785408
      %v595 = vsel %vm593, %v578, %v544
      %v598 = vsel %vm593, %v580, %v546
      %v601 = vsel %vm593, %v582, %v548
      %v604 = vsel %vm593, %v584, %v550
      %v607 = vsel %vm593, %v586, %v552
      %v610 = vsel %vm593, %v588, %v554
      %v613 = vsel %vm593, %v590, %v556
      %v616 = vsel %vm593, %v592, %v558
      %v618 = vld [vmem:[%s2] sm:$0x7]
      %v619 = vld [vmem:[%s1] sm:$0xf]
      %v620 = vld [vmem:[%s1 + $0x4] sm:$0xf]
      %v621 = vld [vmem:[%s1 + $0x8] sm:$0xf]
      %v622 = vld [vmem:[%s1 + $0xc] sm:$0xf]
      %v623 = vld [vmem:[%s1 + $0x10] sm:$0xf]
      %v624 = vld [vmem:[%s1 + $0x14] sm:$0xf]
      %v625 = vld [vmem:[%s1 + $0x18] sm:$0xf]
      %v626 = vld [vmem:[%s1 + $0x1c] sm:$0xf]
      %v627 = vld [vmem:[%s1 + $0x20] sm:$0xf]
      %v628 = vld [vmem:[%s1 + $0x24] sm:$0xf]
      %v629 = vld [vmem:[%s1 + $0x28] sm:$0xf]
      %v630 = vld [vmem:[%s1 + $0x2c] sm:$0xf]
      %v631 = vld [vmem:[%s1 + $0x30] sm:$0xf]
      %v632 = vld [vmem:[%s1 + $0x34] sm:$0xf]
      %v633 = vld [vmem:[%s1 + $0x38] sm:$0xf]
      %v634 = vld [vmem:[%s1 + $0x3c] sm:$0xf]
      %v651 = vunpack.c.l.b16 %v619
      %v652 = vunpack.c.l.b16 %v620
      %v653 = vunpack.c.l.b16 %v621
      %v654 = vunpack.c.l.b16 %v622
      %v655 = vunpack.c.l.b16 %v623
      %v656 = vunpack.c.l.b16 %v624
      %v657 = vunpack.c.l.b16 %v625
      %v658 = vunpack.c.l.b16 %v626
      %v659 = vunpack.c.l.b16 %v627
      %v660 = vunpack.c.l.b16 %v628
      %v661 = vunpack.c.l.b16 %v629
      %v662 = vunpack.c.l.b16 %v630
      %v663 = vunpack.c.l.b16 %v631
      %v664 = vunpack.c.l.b16 %v632
      %v665 = vunpack.c.l.b16 %v633
      %v666 = vunpack.c.l.b16 %v634
      %v667 = vpack.c.b16 %v652, %v651
      %v668 = vpack.c.b16 %v654, %v653
      %v669 = vpack.c.b16 %v656, %v655
      %v670 = vpack.c.b16 %v658, %v657
      %v671 = vpack.c.b16 %v660, %v659
      %v672 = vpack.c.b16 %v662, %v661
      %v673 = vpack.c.b16 %v664, %v663
      %v674 = vpack.c.b16 %v666, %v665
      %683 = vmatpush.bf16.msra.mxu0 %v674
      %684 = vmatpush.bf16.msra.mxu0 %v673
      %685 = vmatpush.bf16.msra.mxu0 %v672
      %686 = vmatpush.bf16.msra.mxu0 %v671
      %687 = vmatpush.bf16.msra.mxu0 %v670
      %688 = vmatpush.bf16.msra.mxu0 %v669
      %689 = vmatpush.bf16.msra.mxu0 %v668
      %690 = vmatpush.bf16.msra.mxu0 %v667
      %691 = vmatmul.bf16.gmra.mxu0 %v595
      %v692 = vpop.f32.mrf.mxu0
      %v693 = vadd.f32 0.0, %v692
      %v694 = vpop.f32.mrf.mxu0
      %v695 = vadd.f32 0.0, %v694
      %696 = vmatmul.bf16.gmra.mxu0 %v598
      %v697 = vpop.f32.mrf.mxu0
      %v698 = vadd.f32 0.0, %v697
      %v699 = vpop.f32.mrf.mxu0
      %v700 = vadd.f32 0.0, %v699
      %701 = vmatmul.bf16.gmra.mxu0 %v601
      %v702 = vpop.f32.mrf.mxu0
      %v703 = vadd.f32 0.0, %v702
      %v704 = vpop.f32.mrf.mxu0
      %v705 = vadd.f32 0.0, %v704
      %706 = vmatmul.bf16.gmra.mxu0 %v604
      %v707 = vpop.f32.mrf.mxu0
      %v708 = vadd.f32 0.0, %v707
      %v709 = vpop.f32.mrf.mxu0
      %v710 = vadd.f32 0.0, %v709
      %711 = vmatmul.bf16.gmra.mxu0 %v607
      %v712 = vpop.f32.mrf.mxu0
      %v713 = vadd.f32 0.0, %v712
      %v714 = vpop.f32.mrf.mxu0
      %v715 = vadd.f32 0.0, %v714
      %716 = vmatmul.bf16.gmra.mxu0 %v610
      %v717 = vpop.f32.mrf.mxu0
      %v718 = vadd.f32 0.0, %v717
      %v719 = vpop.f32.mrf.mxu0
      %v720 = vadd.f32 0.0, %v719
      %721 = vmatmul.bf16.gmra.mxu0 %v613
      %v722 = vpop.f32.mrf.mxu0
      %v723 = vadd.f32 0.0, %v722
      %v724 = vpop.f32.mrf.mxu0
      %v725 = vadd.f32 0.0, %v724
      %726 = vmatmul.bf16.gmra.mxu0 %v616
      %v727 = vpop.f32.mrf.mxu0
      %v728 = vadd.f32 0.0, %v727
      %v729 = vpop.f32.mrf.mxu0
      %v730 = vadd.f32 0.0, %v729
      %731 = vdwg.mxu0
      %vm732 = vcmask 1046528
      %v733 = vsel %vm732, %v695, -inf
      %v734 = vmax.f32 %v693, %v733
      %v735 = vrot.slane %v734, 4
      %v736 = vmax.f32 %v734, %v735
      %v737 = vrot.slane %v736, 2
      %v738 = vmax.f32 %v736, %v737
      %v739 = vrot.slane %v738, 1
      %v740 = vmax.f32 %v738, %v739
      %v741 = vsel %vm732, %v700, -inf
      %v742 = vmax.f32 %v698, %v741
      %v743 = vrot.slane %v742, 4
      %v744 = vmax.f32 %v742, %v743
      %v745 = vrot.slane %v744, 2
      %v746 = vmax.f32 %v744, %v745
      %v747 = vrot.slane %v746, 1
      %v748 = vmax.f32 %v746, %v747
      %v749 = vsel %vm732, %v705, -inf
      %v750 = vmax.f32 %v703, %v749
      %v751 = vrot.slane %v750, 4
      %v752 = vmax.f32 %v750, %v751
      %v753 = vrot.slane %v752, 2
      %v754 = vmax.f32 %v752, %v753
      %v755 = vrot.slane %v754, 1
      %v756 = vmax.f32 %v754, %v755
      %v757 = vsel %vm732, %v710, -inf
      %v758 = vmax.f32 %v708, %v757
      %v759 = vrot.slane %v758, 4
      %v760 = vmax.f32 %v758, %v759
      %v761 = vrot.slane %v760, 2
      %v762 = vmax.f32 %v760, %v761
      %v763 = vrot.slane %v762, 1
      %v764 = vmax.f32 %v762, %v763
      %v765 = vsel %vm732, %v715, -inf
      %v766 = vmax.f32 %v713, %v765
      %v767 = vrot.slane %v766, 4
      %v768 = vmax.f32 %v766, %v767
      %v769 = vrot.slane %v768, 2
      %v770 = vmax.f32 %v768, %v769
      %v771 = vrot.slane %v770, 1
      %v772 = vmax.f32 %v770, %v771
      %v773 = vsel %vm732, %v720, -inf
      %v774 = vmax.f32 %v718, %v773
      %v775 = vrot.slane %v774, 4
      %v776 = vmax.f32 %v774, %v775
      %v777 = vrot.slane %v776, 2
      %v778 = vmax.f32 %v776, %v777
      %v779 = vrot.slane %v778, 1
      %v780 = vmax.f32 %v778, %v779
      %v781 = vsel %vm732, %v725, -inf
      %v782 = vmax.f32 %v723, %v781
      %v783 = vrot.slane %v782, 4
      %v784 = vmax.f32 %v782, %v783
      %v785 = vrot.slane %v784, 2
      %v786 = vmax.f32 %v784, %v785
      %v787 = vrot.slane %v786, 1
      %v788 = vmax.f32 %v786, %v787
      %v789 = vsel %vm732, %v730, -inf
      %v790 = vmax.f32 %v728, %v789
      %v791 = vrot.slane %v790, 4
      %v792 = vmax.f32 %v790, %v791
      %v793 = vrot.slane %v792, 2
      %v794 = vmax.f32 %v792, %v793
      %v795 = vrot.slane %v794, 1
      %v796 = vmax.f32 %v794, %v795
      %v797 = vperm.slane %v618, 0
      %v798 = vadd.f32 %v740, %v797
      %v799 = vadd.f32 %v748, %v797
      %v800 = vadd.f32 %v756, %v797
      %v801 = vadd.f32 %v764, %v797
      %v802 = vadd.f32 %v772, %v797
      %v803 = vadd.f32 %v780, %v797
      %v804 = vadd.f32 %v788, %v797
      %v805 = vadd.f32 %v796, %v797
      %vm806 = vcmp.gt.f32.partialorder %v798, 0.0
      %vm807 = vcmp.gt.f32.partialorder %v799, 0.0
      %vm808 = vcmp.gt.f32.partialorder %v800, 0.0
      %vm809 = vcmp.gt.f32.partialorder %v801, 0.0
      %vm810 = vcmp.gt.f32.partialorder %v802, 0.0
      %vm811 = vcmp.gt.f32.partialorder %v803, 0.0
      %vm812 = vcmp.gt.f32.partialorder %v804, 0.0
      %vm813 = vcmp.gt.f32.partialorder %v805, 0.0
      %v814 = vmul.f32 %v798, 0.01
      %v815 = vmul.f32 %v799, 0.01
      %v816 = vmul.f32 %v800, 0.01
      %v817 = vmul.f32 %v801, 0.01
      %v818 = vmul.f32 %v802, 0.01
      %v819 = vmul.f32 %v803, 0.01
      %v820 = vmul.f32 %v804, 0.01
      %v821 = vmul.f32 %v805, 0.01
      %v822 = vsel %vm806, %v798, %v814
      %v823 = vsel %vm807, %v799, %v815
      %v824 = vsel %vm808, %v800, %v816
      %v825 = vsel %vm809, %v801, %v817
      %v826 = vsel %vm810, %v802, %v818
      %v827 = vsel %vm811, %v803, %v819
      %v828 = vsel %vm812, %v804, %v820
      %v829 = vsel %vm813, %v805, %v821
      %s830 = scalar_lea.vmem %s1, 64
      %v831 = vld [vmem:[%s830] sm:$0xf]
      %v832 = vld [vmem:[%s830 + $0x4] sm:$0xf]
      %v833 = vld [vmem:[%s830 + $0x8] sm:$0xf]
      %v834 = vld [vmem:[%s830 + $0xc] sm:$0xf]
      %v835 = vld [vmem:[%s830 + $0x10] sm:$0xf]
      %v836 = vld [vmem:[%s830 + $0x14] sm:$0xf]
      %v837 = vld [vmem:[%s830 + $0x18] sm:$0xf]
      %v838 = vld [vmem:[%s830 + $0x1c] sm:$0xf]
      %v839 = vld [vmem:[%s830 + $0x20] sm:$0xf]
      %v840 = vld [vmem:[%s830 + $0x24] sm:$0xf]
      %v841 = vld [vmem:[%s830 + $0x28] sm:$0xf]
      %v842 = vld [vmem:[%s830 + $0x2c] sm:$0xf]
      %v843 = vld [vmem:[%s830 + $0x30] sm:$0xf]
      %v844 = vld [vmem:[%s830 + $0x34] sm:$0xf]
      %v845 = vld [vmem:[%s830 + $0x38] sm:$0xf]
      %v846 = vld [vmem:[%s830 + $0x3c] sm:$0xf]
      %v863 = vunpack.c.l.b16 %v831
      %v864 = vunpack.c.l.b16 %v832
      %v865 = vunpack.c.l.b16 %v833
      %v866 = vunpack.c.l.b16 %v834
      %v867 = vunpack.c.l.b16 %v835
      %v868 = vunpack.c.l.b16 %v836
      %v869 = vunpack.c.l.b16 %v837
      %v870 = vunpack.c.l.b16 %v838
      %v871 = vunpack.c.l.b16 %v839
      %v872 = vunpack.c.l.b16 %v840
      %v873 = vunpack.c.l.b16 %v841
      %v874 = vunpack.c.l.b16 %v842
      %v875 = vunpack.c.l.b16 %v843
      %v876 = vunpack.c.l.b16 %v844
      %v877 = vunpack.c.l.b16 %v845
      %v878 = vunpack.c.l.b16 %v846
      %v879 = vpack.c.b16 %v864, %v863
      %v880 = vpack.c.b16 %v866, %v865
      %v881 = vpack.c.b16 %v868, %v867
      %v882 = vpack.c.b16 %v870, %v869
      %v883 = vpack.c.b16 %v872, %v871
      %v884 = vpack.c.b16 %v874, %v873
      %v885 = vpack.c.b16 %v876, %v875
      %v886 = vpack.c.b16 %v878, %v877
      %895 = vmatpush.bf16.msra.mxu0 %v886
      %896 = vmatpush.bf16.msra.mxu0 %v885
      %897 = vmatpush.bf16.msra.mxu0 %v884
      %898 = vmatpush.bf16.msra.mxu0 %v883
      %899 = vmatpush.bf16.msra.mxu0 %v882
      %900 = vmatpush.bf16.msra.mxu0 %v881
      %901 = vmatpush.bf16.msra.mxu0 %v880
      %902 = vmatpush.bf16.msra.mxu0 %v879
      %903 = vmatmul.bf16.gmra.mxu0 %v595
      %v904 = vpop.f32.mrf.mxu0
      %v905 = vadd.f32 0.0, %v904
      %v906 = vpop.f32.mrf.mxu0
      %v907 = vadd.f32 0.0, %v906
      %908 = vmatmul.bf16.gmra.mxu0 %v598
      %v909 = vpop.f32.mrf.mxu0
      %v910 = vadd.f32 0.0, %v909
      %v911 = vpop.f32.mrf.mxu0
      %v912 = vadd.f32 0.0, %v911
      %913 = vmatmul.bf16.gmra.mxu0 %v601
      %v914 = vpop.f32.mrf.mxu0
      %v915 = vadd.f32 0.0, %v914
      %v916 = vpop.f32.mrf.mxu0
      %v917 = vadd.f32 0.0, %v916
      %918 = vmatmul.bf16.gmra.mxu0 %v604
      %v919 = vpop.f32.mrf.mxu0
      %v920 = vadd.f32 0.0, %v919
      %v921 = vpop.f32.mrf.mxu0
      %v922 = vadd.f32 0.0, %v921
      %923 = vmatmul.bf16.gmra.mxu0 %v607
      %v924 = vpop.f32.mrf.mxu0
      %v925 = vadd.f32 0.0, %v924
      %v926 = vpop.f32.mrf.mxu0
      %v927 = vadd.f32 0.0, %v926
      %928 = vmatmul.bf16.gmra.mxu0 %v610
      %v929 = vpop.f32.mrf.mxu0
      %v930 = vadd.f32 0.0, %v929
      %v931 = vpop.f32.mrf.mxu0
      %v932 = vadd.f32 0.0, %v931
      %933 = vmatmul.bf16.gmra.mxu0 %v613
      %v934 = vpop.f32.mrf.mxu0
      %v935 = vadd.f32 0.0, %v934
      %v936 = vpop.f32.mrf.mxu0
      %v937 = vadd.f32 0.0, %v936
      %938 = vmatmul.bf16.gmra.mxu0 %v616
      %v939 = vpop.f32.mrf.mxu0
      %v940 = vadd.f32 0.0, %v939
      %v941 = vpop.f32.mrf.mxu0
      %v942 = vadd.f32 0.0, %v941
      %943 = vdwg.mxu0
      %vm944 = vcmask 1045504
      %v945 = vsel %vm944, %v907, -inf
      %v946 = vmax.f32 %v905, %v945
      %v947 = vrot.slane %v946, 4
      %v948 = vmax.f32 %v946, %v947
      %v949 = vrot.slane %v948, 2
      %v950 = vmax.f32 %v948, %v949
      %v951 = vrot.slane %v950, 1
      %v952 = vmax.f32 %v950, %v951
      %v953 = vsel %vm944, %v912, -inf
      %v954 = vmax.f32 %v910, %v953
      %v955 = vrot.slane %v954, 4
      %v956 = vmax.f32 %v954, %v955
      %v957 = vrot.slane %v956, 2
      %v958 = vmax.f32 %v956, %v957
      %v959 = vrot.slane %v958, 1
      %v960 = vmax.f32 %v958, %v959
      %v961 = vsel %vm944, %v917, -inf
      %v962 = vmax.f32 %v915, %v961
      %v963 = vrot.slane %v962, 4
      %v964 = vmax.f32 %v962, %v963
      %v965 = vrot.slane %v964, 2
      %v966 = vmax.f32 %v964, %v965
      %v967 = vrot.slane %v966, 1
      %v968 = vmax.f32 %v966, %v967
      %v969 = vsel %vm944, %v922, -inf
      %v970 = vmax.f32 %v920, %v969
      %v971 = vrot.slane %v970, 4
      %v972 = vmax.f32 %v970, %v971
      %v973 = vrot.slane %v972, 2
      %v974 = vmax.f32 %v972, %v973
      %v975 = vrot.slane %v974, 1
      %v976 = vmax.f32 %v974, %v975
      %v977 = vsel %vm944, %v927, -inf
      %v978 = vmax.f32 %v925, %v977
      %v979 = vrot.slane %v978, 4
      %v980 = vmax.f32 %v978, %v979
      %v981 = vrot.slane %v980, 2
      %v982 = vmax.f32 %v980, %v981
      %v983 = vrot.slane %v982, 1
      %v984 = vmax.f32 %v982, %v983
      %v985 = vsel %vm944, %v932, -inf
      %v986 = vmax.f32 %v930, %v985
      %v987 = vrot.slane %v986, 4
      %v988 = vmax.f32 %v986, %v987
      %v989 = vrot.slane %v988, 2
      %v990 = vmax.f32 %v988, %v989
      %v991 = vrot.slane %v990, 1
      %v992 = vmax.f32 %v990, %v991
      %v993 = vsel %vm944, %v937, -inf
      %v994 = vmax.f32 %v935, %v993
      %v995 = vrot.slane %v994, 4
      %v996 = vmax.f32 %v994, %v995
      %v997 = vrot.slane %v996, 2
      %v998 = vmax.f32 %v996, %v997
      %v999 = vrot.slane %v998, 1
      %v1000 = vmax.f32 %v998, %v999
      %v1001 = vsel %vm944, %v942, -inf
      %v1002 = vmax.f32 %v940, %v1001
      %v1003 = vrot.slane %v1002, 4
      %v1004 = vmax.f32 %v1002, %v1003
      %v1005 = vrot.slane %v1004, 2
      %v1006 = vmax.f32 %v1004, %v1005
      %v1007 = vrot.slane %v1006, 1
      %v1008 = vmax.f32 %v1006, %v1007
      %v1009 = vperm.slane %v618, 1
      %v1010 = vadd.f32 %v952, %v1009
      %v1011 = vadd.f32 %v960, %v1009
      %v1012 = vadd.f32 %v968, %v1009
      %v1013 = vadd.f32 %v976, %v1009
      %v1014 = vadd.f32 %v984, %v1009
      %v1015 = vadd.f32 %v992, %v1009
      %v1016 = vadd.f32 %v1000, %v1009
      %v1017 = vadd.f32 %v1008, %v1009
      %vm1018 = vcmp.gt.f32.partialorder %v1010, 0.0
      %vm1019 = vcmp.gt.f32.partialorder %v1011, 0.0
      %vm1020 = vcmp.gt.f32.partialorder %v1012, 0.0
      %vm1021 = vcmp.gt.f32.partialorder %v1013, 0.0
      %vm1022 = vcmp.gt.f32.partialorder %v1014, 0.0
      %vm1023 = vcmp.gt.f32.partialorder %v1015, 0.0
      %vm1024 = vcmp.gt.f32.partialorder %v1016, 0.0
      %vm1025 = vcmp.gt.f32.partialorder %v1017, 0.0
      %v1026 = vmul.f32 %v1010, 0.01
      %v1027 = vmul.f32 %v1011, 0.01
      %v1028 = vmul.f32 %v1012, 0.01
      %v1029 = vmul.f32 %v1013, 0.01
      %v1030 = vmul.f32 %v1014, 0.01
      %v1031 = vmul.f32 %v1015, 0.01
      %v1032 = vmul.f32 %v1016, 0.01
      %v1033 = vmul.f32 %v1017, 0.01
      %v1034 = vsel %vm1018, %v1010, %v1026
      %v1035 = vsel %vm1019, %v1011, %v1027
      %v1036 = vsel %vm1020, %v1012, %v1028
      %v1037 = vsel %vm1021, %v1013, %v1029
      %v1038 = vsel %vm1022, %v1014, %v1030
      %v1039 = vsel %vm1023, %v1015, %v1031
      %v1040 = vsel %vm1024, %v1016, %v1032
      %v1041 = vsel %vm1025, %v1017, %v1033
      %s1042 = scalar_lea.vmem %s1, 128
      %v1043 = vld [vmem:[%s1042] sm:$0xf]
      %v1044 = vld [vmem:[%s1042 + $0x4] sm:$0xf]
      %v1045 = vld [vmem:[%s1042 + $0x8] sm:$0xf]
      %v1046 = vld [vmem:[%s1042 + $0xc] sm:$0xf]
      %v1047 = vld [vmem:[%s1042 + $0x10] sm:$0xf]
      %v1048 = vld [vmem:[%s1042 + $0x14] sm:$0xf]
      %v1049 = vld [vmem:[%s1042 + $0x18] sm:$0xf]
      %v1050 = vld [vmem:[%s1042 + $0x1c] sm:$0xf]
      %v1051 = vld [vmem:[%s1042 + $0x20] sm:$0xf]
      %v1052 = vld [vmem:[%s1042 + $0x24] sm:$0xf]
      %v1053 = vld [vmem:[%s1042 + $0x28] sm:$0xf]
      %v1054 = vld [vmem:[%s1042 + $0x2c] sm:$0xf]
      %v1055 = vld [vmem:[%s1042 + $0x30] sm:$0xf]
      %v1056 = vld [vmem:[%s1042 + $0x34] sm:$0xf]
      %v1057 = vld [vmem:[%s1042 + $0x38] sm:$0xf]
      %v1058 = vld [vmem:[%s1042 + $0x3c] sm:$0xf]
      %v1075 = vunpack.c.l.b16 %v1043
      %v1076 = vunpack.c.l.b16 %v1044
      %v1077 = vunpack.c.l.b16 %v1045
      %v1078 = vunpack.c.l.b16 %v1046
      %v1079 = vunpack.c.l.b16 %v1047
      %v1080 = vunpack.c.l.b16 %v1048
      %v1081 = vunpack.c.l.b16 %v1049
      %v1082 = vunpack.c.l.b16 %v1050
      %v1083 = vunpack.c.l.b16 %v1051
      %v1084 = vunpack.c.l.b16 %v1052
      %v1085 = vunpack.c.l.b16 %v1053
      %v1086 = vunpack.c.l.b16 %v1054
      %v1087 = vunpack.c.l.b16 %v1055
      %v1088 = vunpack.c.l.b16 %v1056
      %v1089 = vunpack.c.l.b16 %v1057
      %v1090 = vunpack.c.l.b16 %v1058
      %v1091 = vpack.c.b16 %v1076, %v1075
      %v1092 = vpack.c.b16 %v1078, %v1077
      %v1093 = vpack.c.b16 %v1080, %v1079
      %v1094 = vpack.c.b16 %v1082, %v1081
      %v1095 = vpack.c.b16 %v1084, %v1083
      %v1096 = vpack.c.b16 %v1086, %v1085
      %v1097 = vpack.c.b16 %v1088, %v1087
      %v1098 = vpack.c.b16 %v1090, %v1089
      %1107 = vmatpush.bf16.msra.mxu0 %v1098
      %1108 = vmatpush.bf16.msra.mxu0 %v1097
      %1109 = vmatpush.bf16.msra.mxu0 %v1096
      %1110 = vmatpush.bf16.msra.mxu0 %v1095
      %1111 = vmatpush.bf16.msra.mxu0 %v1094
      %1112 = vmatpush.bf16.msra.mxu0 %v1093
      %1113 = vmatpush.bf16.msra.mxu0 %v1092
      %1114 = vmatpush.bf16.msra.mxu0 %v1091
      %1115 = vmatmul.bf16.gmra.mxu0 %v595
      %v1116 = vpop.f32.mrf.mxu0
      %v1117 = vadd.f32 0.0, %v1116
      %v1118 = vpop.f32.mrf.mxu0
      %v1119 = vadd.f32 0.0, %v1118
      %1120 = vmatmul.bf16.gmra.mxu0 %v598
      %v1121 = vpop.f32.mrf.mxu0
      %v1122 = vadd.f32 0.0, %v1121
      %v1123 = vpop.f32.mrf.mxu0
      %v1124 = vadd.f32 0.0, %v1123
      %1125 = vmatmul.bf16.gmra.mxu0 %v601
      %v1126 = vpop.f32.mrf.mxu0
      %v1127 = vadd.f32 0.0, %v1126
      %v1128 = vpop.f32.mrf.mxu0
      %v1129 = vadd.f32 0.0, %v1128
      %1130 = vmatmul.bf16.gmra.mxu0 %v604
      %v1131 = vpop.f32.mrf.mxu0
      %v1132 = vadd.f32 0.0, %v1131
      %v1133 = vpop.f32.mrf.mxu0
      %v1134 = vadd.f32 0.0, %v1133
      %1135 = vmatmul.bf16.gmra.mxu0 %v607
      %v1136 = vpop.f32.mrf.mxu0
      %v1137 = vadd.f32 0.0, %v1136
      %v1138 = vpop.f32.mrf.mxu0
      %v1139 = vadd.f32 0.0, %v1138
      %1140 = vmatmul.bf16.gmra.mxu0 %v610
      %v1141 = vpop.f32.mrf.mxu0
      %v1142 = vadd.f32 0.0, %v1141
      %v1143 = vpop.f32.mrf.mxu0
      %v1144 = vadd.f32 0.0, %v1143
      %1145 = vmatmul.bf16.gmra.mxu0 %v613
      %v1146 = vpop.f32.mrf.mxu0
      %v1147 = vadd.f32 0.0, %v1146
      %v1148 = vpop.f32.mrf.mxu0
      %v1149 = vadd.f32 0.0, %v1148
      %1150 = vmatmul.bf16.gmra.mxu0 %v616
      %v1151 = vpop.f32.mrf.mxu0
      %v1152 = vadd.f32 0.0, %v1151
      %v1153 = vpop.f32.mrf.mxu0
      %v1154 = vadd.f32 0.0, %v1153
      %1155 = vdwg.mxu0
      %vm1156 = vcmask 1044480
      %v1157 = vsel %vm1156, %v1119, -inf
      %v1158 = vmax.f32 %v1117, %v1157
      %v1159 = vrot.slane %v1158, 4
      %v1160 = vmax.f32 %v1158, %v1159
      %v1161 = vrot.slane %v1160, 2
      %v1162 = vmax.f32 %v1160, %v1161
      %v1163 = vrot.slane %v1162, 1
      %v1164 = vmax.f32 %v1162, %v1163
      %v1165 = vsel %vm1156, %v1124, -inf
      %v1166 = vmax.f32 %v1122, %v1165
      %v1167 = vrot.slane %v1166, 4
      %v1168 = vmax.f32 %v1166, %v1167
      %v1169 = vrot.slane %v1168, 2
      %v1170 = vmax.f32 %v1168, %v1169
      %v1171 = vrot.slane %v1170, 1
      %v1172 = vmax.f32 %v1170, %v1171
      %v1173 = vsel %vm1156, %v1129, -inf
      %v1174 = vmax.f32 %v1127, %v1173
      %v1175 = vrot.slane %v1174, 4
      %v1176 = vmax.f32 %v1174, %v1175
      %v1177 = vrot.slane %v1176, 2
      %v1178 = vmax.f32 %v1176, %v1177
      %v1179 = vrot.slane %v1178, 1
      %v1180 = vmax.f32 %v1178, %v1179
      %v1181 = vsel %vm1156, %v1134, -inf
      %v1182 = vmax.f32 %v1132, %v1181
      %v1183 = vrot.slane %v1182, 4
      %v1184 = vmax.f32 %v1182, %v1183
      %v1185 = vrot.slane %v1184, 2
      %v1186 = vmax.f32 %v1184, %v1185
      %v1187 = vrot.slane %v1186, 1
      %v1188 = vmax.f32 %v1186, %v1187
      %v1189 = vsel %vm1156, %v1139, -inf
      %v1190 = vmax.f32 %v1137, %v1189
      %v1191 = vrot.slane %v1190, 4
      %v1192 = vmax.f32 %v1190, %v1191
      %v1193 = vrot.slane %v1192, 2
      %v1194 = vmax.f32 %v1192, %v1193
      %v1195 = vrot.slane %v1194, 1
      %v1196 = vmax.f32 %v1194, %v1195
      %v1197 = vsel %vm1156, %v1144, -inf
      %v1198 = vmax.f32 %v1142, %v1197
      %v1199 = vrot.slane %v1198, 4
      %v1200 = vmax.f32 %v1198, %v1199
      %v1201 = vrot.slane %v1200, 2
      %v1202 = vmax.f32 %v1200, %v1201
      %v1203 = vrot.slane %v1202, 1
      %v1204 = vmax.f32 %v1202, %v1203
      %v1205 = vsel %vm1156, %v1149, -inf
      %v1206 = vmax.f32 %v1147, %v1205
      %v1207 = vrot.slane %v1206, 4
      %v1208 = vmax.f32 %v1206, %v1207
      %v1209 = vrot.slane %v1208, 2
      %v1210 = vmax.f32 %v1208, %v1209
      %v1211 = vrot.slane %v1210, 1
      %v1212 = vmax.f32 %v1210, %v1211
      %v1213 = vsel %vm1156, %v1154, -inf
      %v1214 = vmax.f32 %v1152, %v1213
      %v1215 = vrot.slane %v1214, 4
      %v1216 = vmax.f32 %v1214, %v1215
      %v1217 = vrot.slane %v1216, 2
      %v1218 = vmax.f32 %v1216, %v1217
      %v1219 = vrot.slane %v1218, 1
      %v1220 = vmax.f32 %v1218, %v1219
      %v1221 = vperm.slane %v618, 2
      %v1222 = vadd.f32 %v1164, %v1221
      %v1223 = vadd.f32 %v1172, %v1221
      %v1224 = vadd.f32 %v1180, %v1221
      %v1225 = vadd.f32 %v1188, %v1221
      %v1226 = vadd.f32 %v1196, %v1221
      %v1227 = vadd.f32 %v1204, %v1221
      %v1228 = vadd.f32 %v1212, %v1221
      %v1229 = vadd.f32 %v1220, %v1221
      %vm1230 = vcmp.gt.f32.partialorder %v1222, 0.0
      %vm1231 = vcmp.gt.f32.partialorder %v1223, 0.0
      %vm1232 = vcmp.gt.f32.partialorder %v1224, 0.0
      %vm1233 = vcmp.gt.f32.partialorder %v1225, 0.0
      %vm1234 = vcmp.gt.f32.partialorder %v1226, 0.0
      %vm1235 = vcmp.gt.f32.partialorder %v1227, 0.0
      %vm1236 = vcmp.gt.f32.partialorder %v1228, 0.0
      %vm1237 = vcmp.gt.f32.partialorder %v1229, 0.0
      %v1238 = vmul.f32 %v1222, 0.01
      %v1239 = vmul.f32 %v1223, 0.01
      %v1240 = vmul.f32 %v1224, 0.01
      %v1241 = vmul.f32 %v1225, 0.01
      %v1242 = vmul.f32 %v1226, 0.01
      %v1243 = vmul.f32 %v1227, 0.01
      %v1244 = vmul.f32 %v1228, 0.01
      %v1245 = vmul.f32 %v1229, 0.01
      %v1246 = vsel %vm1230, %v1222, %v1238
      %v1247 = vsel %vm1231, %v1223, %v1239
      %v1248 = vsel %vm1232, %v1224, %v1240
      %v1249 = vsel %vm1233, %v1225, %v1241
      %v1250 = vsel %vm1234, %v1226, %v1242
      %v1251 = vsel %vm1235, %v1227, %v1243
      %v1252 = vsel %vm1236, %v1228, %v1244
      %v1253 = vsel %vm1237, %v1229, %v1245
      %v1262 = vrot.slane %v823, 7
      %vm1263 = vcmask 1041409
      %v1264 = vsel %vm1263, %v1262, %v822
      %v1265 = vrot.slane %v824, 6
      %vm1266 = vcmask 1042434
      %v1267 = vsel %vm1266, %v1265, %v1264
      %v1268 = vrot.slane %v825, 5
      %vm1269 = vcmask 1043459
      %v1270 = vsel %vm1269, %v1268, %v1267
      %v1271 = vrot.slane %v826, 4
      %vm1272 = vcmask 1044484
      %v1273 = vsel %vm1272, %v1271, %v1270
      %v1274 = vrot.slane %v827, 3
      %vm1275 = vcmask 1045509
      %v1276 = vsel %vm1275, %v1274, %v1273
      %v1277 = vrot.slane %v828, 2
      %vm1278 = vcmask 1046534
      %v1279 = vsel %vm1278, %v1277, %v1276
      %v1280 = vrot.slane %v829, 1
      %vm1281 = vcmask 1047559
      %v1282 = vsel %vm1281, %v1280, %v1279
      %v1292 = vrot.slane %v1035, 7
      %v1293 = vsel %vm1263, %v1292, %v1034
      %v1294 = vrot.slane %v1036, 6
      %v1295 = vsel %vm1266, %v1294, %v1293
      %v1296 = vrot.slane %v1037, 5
      %v1297 = vsel %vm1269, %v1296, %v1295
      %v1298 = vrot.slane %v1038, 4
      %v1299 = vsel %vm1272, %v1298, %v1297
      %v1300 = vrot.slane %v1039, 3
      %v1301 = vsel %vm1275, %v1300, %v1299
      %v1302 = vrot.slane %v1040, 2
      %v1303 = vsel %vm1278, %v1302, %v1301
      %v1304 = vrot.slane %v1041, 1
      %v1305 = vsel %vm1281, %v1304, %v1303
      %v1315 = vrot.slane %v1247, 7
      %v1316 = vsel %vm1263, %v1315, %v1246
      %v1317 = vrot.slane %v1248, 6
      %v1318 = vsel %vm1266, %v1317, %v1316
      %v1319 = vrot.slane %v1249, 5
      %v1320 = vsel %vm1269, %v1319, %v1318
      %v1321 = vrot.slane %v1250, 4
      %v1322 = vsel %vm1272, %v1321, %v1320
      %v1323 = vrot.slane %v1251, 3
      %v1324 = vsel %vm1275, %v1323, %v1322
      %v1325 = vrot.slane %v1252, 2
      %v1326 = vsel %vm1278, %v1325, %v1324
      %v1327 = vrot.slane %v1253, 1
      %v1328 = vsel %vm1281, %v1327, %v1326
      %v1330 = vld [vmem:[%s3] sm:$0xff]
      %v1331 = vld [vmem:[%s3 + $0x8] sm:$0xff]
      %v1332 = vld [vmem:[%s3 + $0x10] sm:$0xff]
      %v1333 = vld [vmem:[%s3 + $0x18] sm:$0xff]
      %v1334 = vld [vmem:[%s3 + $0x20] sm:$0xff]
      %v1335 = vld [vmem:[%s3 + $0x28] sm:$0xff]
      %v1336 = vld [vmem:[%s3 + $0x30] sm:$0xff]
      %v1337 = vld [vmem:[%s3 + $0x38] sm:$0xff]
      %v1338 = vld [vmem:[%s3 + $0x40] sm:$0xff]
      %v1339 = vld [vmem:[%s3 + $0x48] sm:$0xff]
      %v1340 = vld [vmem:[%s3 + $0x50] sm:$0xff]
      %v1341 = vld [vmem:[%s3 + $0x58] sm:$0xff]
      %v1342 = vld [vmem:[%s3 + $0x60] sm:$0xff]
      %v1343 = vld [vmem:[%s3 + $0x68] sm:$0xff]
      %v1344 = vld [vmem:[%s3 + $0x70] sm:$0xff]
      %v1345 = vld [vmem:[%s3 + $0x78] sm:$0xff]
      %v1346 = vld [vmem:[%s3 + $0x80] sm:$0xff]
      %v1347 = vld [vmem:[%s3 + $0x88] sm:$0xff]
      %v1348 = vld [vmem:[%s3 + $0x90] sm:$0xff]
      %v1349 = vld [vmem:[%s3 + $0x98] sm:$0xff]
      %v1350 = vld [vmem:[%s3 + $0xa0] sm:$0xff]
      %v1351 = vld [vmem:[%s3 + $0xa8] sm:$0xff]
      %v1352 = vld [vmem:[%s3 + $0xb0] sm:$0xff]
      %v1353 = vld [vmem:[%s3 + $0xb8] sm:$0xff]
      %v1354 = vld [vmem:[%s3 + $0xc0] sm:$0xff]
      %v1355 = vld [vmem:[%s3 + $0xc8] sm:$0xff]
      %v1356 = vld [vmem:[%s3 + $0xd0] sm:$0xff]
      %v1357 = vld [vmem:[%s3 + $0xd8] sm:$0xff]
      %v1358 = vld [vmem:[%s3 + $0xe0] sm:$0xff]
      %v1359 = vld [vmem:[%s3 + $0xe8] sm:$0xff]
      %v1360 = vld [vmem:[%s3 + $0xf0] sm:$0xff]
      %v1361 = vld [vmem:[%s3 + $0xf8] sm:$0xff]
      %v1362 = vld [vmem:[%s3 + $0x100] sm:$0xff]
      %v1363 = vld [vmem:[%s3 + $0x108] sm:$0xff]
      %v1364 = vld [vmem:[%s3 + $0x110] sm:$0xff]
      %v1365 = vld [vmem:[%s3 + $0x118] sm:$0xff]
      %v1366 = vld [vmem:[%s3 + $0x120] sm:$0xff]
      %v1367 = vld [vmem:[%s3 + $0x128] sm:$0xff]
      %v1368 = vld [vmem:[%s3 + $0x130] sm:$0xff]
      %v1369 = vld [vmem:[%s3 + $0x138] sm:$0xff]
      %v1370 = vld [vmem:[%s3 + $0x140] sm:$0xff]
      %v1371 = vld [vmem:[%s3 + $0x148] sm:$0xff]
      %v1372 = vld [vmem:[%s3 + $0x150] sm:$0xff]
      %v1373 = vld [vmem:[%s3 + $0x158] sm:$0xff]
      %v1374 = vld [vmem:[%s3 + $0x160] sm:$0xff]
      %v1375 = vld [vmem:[%s3 + $0x168] sm:$0xff]
      %v1376 = vld [vmem:[%s3 + $0x170] sm:$0xff]
      %v1377 = vld [vmem:[%s3 + $0x178] sm:$0xff]
      %v1378 = vld [vmem:[%s4] sm:$0x1]
      %v1380 = vperm.slane %v1378, 0
      %1382 = vmatpush.msra.mxu0 %v1345
      %1383 = vmatpush.msra.mxu0 %v1344
      %1384 = vmatpush.msra.mxu0 %v1343
      %1385 = vmatpush.msra.mxu0 %v1342
      %1386 = vmatpush.msra.mxu0 %v1341
      %1387 = vmatpush.msra.mxu0 %v1340
      %1388 = vmatpush.msra.mxu0 %v1339
      %1389 = vmatpush.msra.mxu0 %v1338
      %1390 = vmatpush.msra.mxu0 %v1337
      %1391 = vmatpush.msra.mxu0 %v1336
      %1392 = vmatpush.msra.mxu0 %v1335
      %1393 = vmatpush.msra.mxu0 %v1334
      %1394 = vmatpush.msra.mxu0 %v1333
      %1395 = vmatpush.msra.mxu0 %v1332
      %1396 = vmatpush.msra.mxu0 %v1331
      %1397 = vmatpush.msra.mxu0 %v1330
      %1398 = vmatmul.f32.gmra.mxu0 %v1282
      %v1399 = vpop.f32.mrf.mxu0
      %v1400 = vadd.f32 %v1380, %v1399
      %1401 = vdwg.mxu0
      %1402 = vmatpush.msra.mxu0 %v1361
      %1403 = vmatpush.msra.mxu0 %v1360
      %1404 = vmatpush.msra.mxu0 %v1359
      %1405 = vmatpush.msra.mxu0 %v1358
      %1406 = vmatpush.msra.mxu0 %v1357
      %1407 = vmatpush.msra.mxu0 %v1356
      %1408 = vmatpush.msra.mxu0 %v1355
      %1409 = vmatpush.msra.mxu0 %v1354
      %1410 = vmatpush.msra.mxu0 %v1353
      %1411 = vmatpush.msra.mxu0 %v1352
      %1412 = vmatpush.msra.mxu0 %v1351
      %1413 = vmatpush.msra.mxu0 %v1350
      %1414 = vmatpush.msra.mxu0 %v1349
      %1415 = vmatpush.msra.mxu0 %v1348
      %1416 = vmatpush.msra.mxu0 %v1347
      %1417 = vmatpush.msra.mxu0 %v1346
      %1418 = vmatmul.f32.gmra.mxu0 %v1305
      %v1419 = vpop.f32.mrf.mxu0
      %v1420 = vadd.f32 %v1400, %v1419
      %1421 = vdwg.mxu0
      %1422 = vmatpush.msra.mxu0 %v1377
      %1423 = vmatpush.msra.mxu0 %v1376
      %1424 = vmatpush.msra.mxu0 %v1375
      %1425 = vmatpush.msra.mxu0 %v1374
      %1426 = vmatpush.msra.mxu0 %v1373
      %1427 = vmatpush.msra.mxu0 %v1372
      %1428 = vmatpush.msra.mxu0 %v1371
      %1429 = vmatpush.msra.mxu0 %v1370
      %1430 = vmatpush.msra.mxu0 %v1369
      %1431 = vmatpush.msra.mxu0 %v1368
      %1432 = vmatpush.msra.mxu0 %v1367
      %1433 = vmatpush.msra.mxu0 %v1366
      %1434 = vmatpush.msra.mxu0 %v1365
      %1435 = vmatpush.msra.mxu0 %v1364
      %1436 = vmatpush.msra.mxu0 %v1363
      %1437 = vmatpush.msra.mxu0 %v1362
      %1438 = vmatmul.f32.gmra.mxu0 %v1328
      %v1439 = vpop.f32.mrf.mxu0
      %v1440 = vadd.f32 %v1420, %v1439
      %1441 = vdwg.mxu0
      %1442 = vst [vmem:[%s227] sm:$0xff] %v1440
      %p1443 = scmp.lt.s32.totalorder %s16, 1
      %s1444 = scalar_select %p1443, %s16, 1
      %s1445 = smul.addr %s1444, 8
      %s1446 = scalar_lea.vmem %s5, %s1445
      // Predicated region
      $region41: #{text_cnn_forward.1} parent=39 // pred_check
        %p1447 = pneg %p144
      $region42: #{text_cnn_forward.1} parent=39 // pred_check_branch
        %1449 = sbr.rel (%p1447) target = $region44
      $region43: #{text_cnn_forward.1} parent=39 // pred_region
        _
      $region44: #{text_cnn_forward.1} parent=39 // pred_fallthru
        _
    $region40: #{text_cnn_forward.1} parent=5 // pred_fallthru
      _
    %p1450 = scmp.le.s32.totalorder 2, %s11
    // Predicated region
    $region45: #{text_cnn_forward.1} parent=5 // pred_check
      %p1451 = pneg %p1450
    $region46: #{text_cnn_forward.1} parent=5 // pred_check_branch
      %1453 = sbr.rel (%p1451) target = $region48
    $region47: #{text_cnn_forward.1} parent=5 // pred_region
      %s1454 = ssub.s32 %s11, 2
      // Predicated region
      $region49: #{text_cnn_forward.1} parent=47 // pred_check
        %p1455 = pneg %p150
      $region50: #{text_cnn_forward.1} parent=47 // pred_check_branch
        %1457 = sbr.rel (%p1455) target = $region52
      $region51: #{text_cnn_forward.1} parent=47 // pred_region
        %p1458 = scmp.lt.s32.totalorder %s17, 1
        %s1459 = scalar_select %p1458, %s17, 1
        %s1460 = smul.addr %s1459, 8
        %s1461 = scalar_lea.vmem %s5, %s1460
      $region52: #{text_cnn_forward.1} parent=47 // pred_fallthru
        _
    $region48: #{text_cnn_forward.1} parent=5 // pred_fallthru
      _
  $region6: #{text_cnn_forward.1} parent=0 // loop_footer
    %s15 = sadd.s32 1, %s11
  $region7: #{text_cnn_forward.1} parent=0 // loop_footer_branch
    %10 = sbr.rel target = $region3
  $region8: #{text_cnn_forward.1} parent=0 // loop_exit
    _

</llo_original>
